<compile_context>
chip_gen: v5e
topology: v5e:2x2
jax: 0.10.0
libtpu: 0.0.40
codegen_flags: <defaults>
</compile_context>

<pallas_src>
import functools
import math

import jax
import jax.numpy as jnp
import numpy as np
from jax.experimental import pallas as pl
from jax.experimental.pallas import tpu as pltpu


# ---------------------------------------------------------------------------
# Stage 1: fused QKV projection (bf16 MXU, f32 accumulate), head-major output.
# ---------------------------------------------------------------------------
def _qkv_proj_kernel(x_ref, wqkv_ref, bqkv_ref, q_ref, k_ref, v_ref,
                     *, n_head, head_dim):
    C = n_head * head_dim
    scale = 1.0 / math.sqrt(head_dim)

    x = x_ref[0]                                               # (tile, C) bf16 (pre-cast)
    # Single fused matmul: N = 3C keeps the MXU better fed than 3 C-wide matmuls
    # and needs only one weight DMA stream.
    acc = jnp.dot(x, wqkv_ref[...],
                  preferred_element_type=jnp.float32)          # (tile, 3C) f32
    acc = acc + bqkv_ref[0]                                    # f32 bias add

    # Cast to bf16 BEFORE the per-head slicing so the lane extracts move half the bytes.
    q_bf = (acc[:, 0:C] * scale).astype(q_ref.dtype)           # fold 1/sqrt(D) here
    k_bf = acc[:, C:2 * C].astype(k_ref.dtype)
    v_bf = acc[:, 2 * C:3 * C].astype(v_ref.dtype)

    # TODO(synk): for head_dim < 128 the (B,H,T,D) layout is inherently lane-sparse; a
    # lane-dense (B,T,C) intermediate (head reshuffle done once in stage 2) or a single
    # reshape+transpose epilogue would cut the per-head slice/store work further.
    for h in range(n_head):
        sl = slice(h * head_dim, (h + 1) * head_dim)
        q_ref[0, h] = q_bf[:, sl]
        k_ref[0, h] = k_bf[:, sl]
        v_ref[0, h] = v_bf[:, sl]


# ---------------------------------------------------------------------------
# Stage 2: flash-style causal attention + fused output projection.
# Grid: (batch, lower-triangular (qi, ki) pairs) driven by scalar-prefetched tables.
# ---------------------------------------------------------------------------
def _flash_attn_kernel(qi_tbl, ki_tbl, q_ref, k_ref, v_ref, wp_ref, bp_ref, o_ref,
                       m_sc, l_sc, acc_sc,
                       *, tq, tk, n_head, head_dim, use_bf16_exp):
    pidx = pl.program_id(1)
    qi = qi_tbl[pidx]                                          # q-tile index (SMEM scalar)
    ki = ki_tbl[pidx]                                          # kv-tile index (SMEM scalar)

    is_first = ki == 0                                         # first kv tile of this q row
    is_last = (ki + 1) * tk >= (qi + 1) * tq                   # last kv tile of this q row
    needs_mask = (ki + 1) * tk - 1 > qi * tq                   # tile straddles the diagonal

    @pl.when(is_first)
    def _init():
        m_sc[...] = jnp.full(m_sc.shape, -jnp.inf, dtype=m_sc.dtype)
        l_sc[...] = jnp.zeros(l_sc.shape, dtype=l_sc.dtype)
        acc_sc[...] = jnp.zeros(acc_sc.shape, dtype=acc_sc.dtype)

    q = q_ref[0]                                               # (H, tq, D) bf16, pre-scaled
    k = k_ref[0]                                               # (H, tk, D) bf16
    v = v_ref[0]                                               # (H, tk, D) bf16

    # Head-batched scores on the MXU, accumulated in f32.
    s = jnp.einsum("hqd,hkd->hqk", q, k,
                   preferred_element_type=jnp.float32)         # (H, tq, tk)

    def _online_update(scores):
        m_prev = m_sc[...]                                     # (H, tq, 1) f32
        m_new = jnp.maximum(m_prev, jnp.max(scores, axis=-1, keepdims=True))
        alpha = jnp.exp(m_prev - m_new)
        if use_bf16_exp:
            # bf16 EUP exp (v6e/v7x): ~2x exp throughput; l-sum and acc stay f32.
            p = jnp.exp((scores - m_new).astype(jnp.bfloat16)) # (H, tq, tk) bf16
            l_sc[...] = alpha * l_sc[...] + jnp.sum(p, axis=-1, keepdims=True,
                                                    dtype=jnp.float32)
            pv = jnp.einsum("hqk,hkd->hqd", p, v,
                            preferred_element_type=jnp.float32)
        else:
            p = jnp.exp(scores - m_new)                        # f32 (v5e: no bf16 EUP)
            l_sc[...] = alpha * l_sc[...] + jnp.sum(p, axis=-1, keepdims=True)
            pv = jnp.einsum("hqk,hkd->hqd", p.astype(v.dtype), v,
                            preferred_element_type=jnp.float32)
        acc_sc[...] = alpha * acc_sc[...] + pv                 # (H, tq, D) f32
        m_sc[...] = m_new

    # Causal mask only where needed (diagonal-straddling tiles); interior tiles skip
    # the iota + select VPU work entirely.
    @pl.when(needs_mask)
    def _masked():
        row = qi * tq + jax.lax.broadcasted_iota(jnp.int32, (tq, tk), 0)
        col = ki * tk + jax.lax.broadcasted_iota(jnp.int32, (tq, tk), 1)
        _online_update(jnp.where((row >= col)[None, :, :], s, -1e30))

    @pl.when(jnp.logical_not(needs_mask))
    def _interior():
        _online_update(s)

    @pl.when(is_last)
    def _finalize():
        # Normalization via EUP approx reciprocal (essentially free).
        inv_l = pl.reciprocal(l_sc[...], approx=True)          # (H, tq, 1)
        y = acc_sc[...] * inv_l                                # (H, tq, D) f32

        # Output projection fused in as ONE full-K contraction:
        #   concat_h(y_h)  : (tq, C)   then  (tq, C) @ (C, C)
        # -> MXU contraction dim is C (dense), no serial per-head add chain, and the
        #    final store is a lane-dense (tq, C) slab.
        y2d = jnp.concatenate([y[h] for h in range(n_head)], axis=-1)  # (tq, C)
        out = jnp.dot(y2d.astype(jnp.bfloat16), wp_ref[...],
                      preferred_element_type=jnp.float32)
        o_ref[0] = (out + bp_ref[0]).astype(o_ref.dtype)


# ---------------------------------------------------------------------------
# Host wrapper
# ---------------------------------------------------------------------------
def _pick_tile(t_total, target):
    if t_total <= target:
        return t_total
    t = target
    while t > 1 and t_total % t != 0:
        t //= 2
    return t


def causal_self_attention(x, params, n_head):
    """x: (B, T, C) float32. params: dict of pre-transposed weights / biases."""
    B, T, C = x.shape
    assert C % n_head == 0
    D = C // n_head

    # Decoupled q / kv tiles: tq up to 256 (v6e/v7x MXU is 2x256^2; also halves K/V
    # re-reads over HBM), tk up to 128.
    tq = _pick_tile(T, 256)
    tk = _pick_tile(T, 128)
    assert T % tq == 0 and T % tk == 0, "T must be divisible by the sequence tiles"
    nq = T // tq

    # bf16 exp only where the EUP has a bf16 path (v6e / v7x); v5e and older stay f32.
    dev_kind = jax.devices()[0].device_kind.lower()
    use_bf16_exp = ("v6" in dev_kind) or ("v7" in dev_kind)

    # Host-side weight prep: fused QKV weight/bias, bf16 MXU operands. Biases stay f32.
    wqkv = jnp.concatenate([params["wq_t"], params["wk_t"], params["wv_t"]],
                           axis=1).astype(jnp.bfloat16)        # (C, 3C)
    bqkv = jnp.concatenate([params["bq"], params["bk"], params["bv"]],
                           axis=1).astype(jnp.float32)         # (1, 3C)
    wp = params["wp_t"].astype(jnp.bfloat16)                   # (C, C)
    bp = params["bp"].astype(jnp.float32)                      # (1, C)
    x_bf = x.astype(jnp.bfloat16)                              # halve x DMA, no in-kernel cast

    # ---- Stage 1: fused QKV projection -------------------------------------
    tile1 = tq
    qkv_kernel = functools.partial(_qkv_proj_kernel, n_head=n_head, head_dim=D)
    head_shape = jax.ShapeDtypeStruct((B, n_head, T, D), jnp.bfloat16)
    head_out_spec = pl.BlockSpec((1, n_head, tile1, D), lambda b, t: (b, 0, t, 0))

    q, k, v = pl.pallas_call(
        qkv_kernel,
        out_shape=(head_shape, head_shape, head_shape),
        grid_spec=pltpu.PrefetchScalarGridSpec(
            num_scalar_prefetch=0,
            grid=(B, T // tile1),
            in_specs=[
                pl.BlockSpec((1, tile1, C), lambda b, t: (b, t, 0)),    # x tile (bf16)
                pl.BlockSpec((C, 3 * C), lambda b, t: (0, 0)),          # fused W (bf16)
                pl.BlockSpec((1, 3 * C), lambda b, t: (0, 0)),          # fused bias (f32)
            ],
            out_specs=[head_out_spec, head_out_spec, head_out_spec],
        ),
        compiler_params=pltpu.CompilerParams(
            dimension_semantics=("parallel", "parallel")),
    )(x_bf, wqkv, bqkv)

    # ---- Stage 2: flash attention + fused output projection -----------------
    # Lower-triangular (qi, ki) pair tables (scalar-prefetched into SMEM): only the
    # causally-needed KV tiles are ever DMA'd or stepped over.
    pairs_q, pairs_k = [], []
    for qi_ in range(nq):
        k_last = ((qi_ + 1) * tq - 1) // tk
        for ki_ in range(k_last + 1):
            pairs_q.append(qi_)
            pairs_k.append(ki_)
    qi_tbl = jnp.asarray(np.asarray(pairs_q, dtype=np.int32))
    ki_tbl = jnp.asarray(np.asarray(pairs_k, dtype=np.int32))
    n_pairs = len(pairs_q)

    attn_kernel = functools.partial(_flash_attn_kernel, tq=tq, tk=tk,
                                    n_head=n_head, head_dim=D,
                                    use_bf16_exp=use_bf16_exp)

    return pl.pallas_call(
        attn_kernel,
        out_shape=jax.ShapeDtypeStruct((B, T, C), x.dtype),
        grid_spec=pltpu.PrefetchScalarGridSpec(
            num_scalar_prefetch=2,                             # qi_tbl, ki_tbl -> SMEM
            grid=(B, n_pairs),
            in_specs=[
                pl.BlockSpec((1, n_head, tq, D),
                             lambda b, p, qt, kt: (b, 0, qt[p], 0)),    # q
                pl.BlockSpec((1, n_head, tk, D),
                             lambda b, p, qt, kt: (b, 0, kt[p], 0)),    # k
                pl.BlockSpec((1, n_head, tk, D),
                             lambda b, p, qt, kt: (b, 0, kt[p], 0)),    # v
                pl.BlockSpec((C, C), lambda b, p, qt, kt: (0, 0)),      # Wp (bf16)
                pl.BlockSpec((1, C), lambda b, p, qt, kt: (0, 0)),      # bp (f32)
            ],
            out_specs=pl.BlockSpec((1, tq, C),
                                   lambda b, p, qt, kt: (b, qt[p], 0)),
            scratch_shapes=[
                pltpu.VMEM((n_head, tq, 1), jnp.float32),      # running max
                pltpu.VMEM((n_head, tq, 1), jnp.float32),      # running sum
                pltpu.VMEM((n_head, tq, D), jnp.float32),      # output accumulator
            ],
        ),
        compiler_params=pltpu.CompilerParams(
            dimension_semantics=("parallel", "arbitrary")),
    )(qi_tbl, ki_tbl, q, k, v, wp, bp)


# ---------------------------------------------------------------------------
# Pure-JAX f32 reference replicating the PyTorch forward (dropout = identity).
# ---------------------------------------------------------------------------
def _reference(x, params, n_head):
    B, T, C = x.shape
    D = C // n_head
    q = x @ params["wq_t"] + params["bq"][0]
    k = x @ params["wk_t"] + params["bk"][0]
    v = x @ params["wv_t"] + params["bv"][0]
    q = q.reshape(B, T, n_head, D).transpose(0, 2, 1, 3)
    k = k.reshape(B, T, n_head, D).transpose(0, 2, 1, 3)
    v = v.reshape(B, T, n_head, D).transpose(0, 2, 1, 3)
    att = jnp.einsum("bhqd,bhkd->bhqk", q, k) / math.sqrt(D)
    mask = jnp.tril(jnp.ones((T, T), dtype=bool))
    att = jnp.where(mask, att, -1e30)
    att = jax.nn.softmax(att, axis=-1)
    y = jnp.einsum("bhqk,bhkd->bhqd", att, v)
    y = y.transpose(0, 2, 1, 3).reshape(B, T, C)
    return y @ params["wp_t"] + params["bp"][0]


if __name__ == "__main__":
    # Small config consistent with the module: n_embd=32, n_head=4, block_size>=T.
    B, T, C, n_head = 2, 8, 32, 4

    key = jax.random.PRNGKey(0)
    keys = jax.random.split(key, 9)
    bound = 1.0 / math.sqrt(C)   # nn.Linear default uniform bound

    def uni(k, shape):
        return jax.random.uniform(k, shape, jnp.float32, -bound, bound)

    # PyTorch Linear weights are (out, in); store them transposed: (in, out).
    params = {
        "wq_t": uni(keys[0], (C, C)),
        "wk_t": uni(keys[1], (C, C)),
        "wv_t": uni(keys[2], (C, C)),
        "wp_t": uni(keys[3], (C, C)),
        "bq": uni(keys[4], (1, C)),
        "bk": uni(keys[5], (1, C)),
        "bv": uni(keys[6], (1, C)),
        "bp": uni(keys[7], (1, C)),
    }
    x = jax.random.normal(keys[8], (B, T, C), jnp.float32)

    out = jax.block_until_ready(causal_self_attention(x, params, n_head))

    ref = _reference(x, params, n_head)
    # bf16 MXU operands / bf16 exp (f32 accumulation) -> looser tolerance than pure f32.
    np.testing.assert_allclose(np.asarray(out), np.asarray(ref), rtol=2e-2, atol=2e-2)

    print("KERNEL_OK")
</pallas_src>

<mosaic_0001>
module attributes {stable_mosaic.version = 11 : i64} {
  func.func @_qkv_proj_kernel(%arg0: i32, %arg1: i32, %arg2: memref<1x8x32xbf16, #tpu.memory_space<vmem>>, %arg3: memref<32x96xbf16, #tpu.memory_space<vmem>>, %arg4: memref<1x96xf32, #tpu.memory_space<vmem>>, %arg5: memref<1x4x8x8xbf16, #tpu.memory_space<vmem>>, %arg6: memref<1x4x8x8xbf16, #tpu.memory_space<vmem>>, %arg7: memref<1x4x8x8xbf16, #tpu.memory_space<vmem>>) attributes {dimension_semantics = [#tpu.dimension_semantics<parallel>, #tpu.dimension_semantics<parallel>], iteration_bounds = array<i64: 2, 1>, scalar_prefetch = 0 : i64, scratch_operands = 0 : i64, tpu.core_type = #tpu.core_type<tc>, window_params = [{transform_indices = @transform_0, window_bounds = array<i64: 1, 8, 32>}, {pipeline_mode = #tpu.pipeline_mode<synchronous>, transform_indices = @transform_1, window_bounds = array<i64: 32, 96>}, {pipeline_mode = #tpu.pipeline_mode<synchronous>, transform_indices = @transform_2, window_bounds = array<i64: 1, 96>}, {transform_indices = @transform_3, window_bounds = array<i64: 1, 4, 8, 8>}, {transform_indices = @transform_4, window_bounds = array<i64: 1, 4, 8, 8>}, {transform_indices = @transform_5, window_bounds = array<i64: 1, 4, 8, 8>}]} {
    %c0 = arith.constant 0 : index
    %c0_0 = arith.constant 0 : index
    %c0_1 = arith.constant 0 : index
    %0 = vector.load %arg2[%c0, %c0_0, %c0_1] : memref<1x8x32xbf16, #tpu.memory_space<vmem>>, vector<1x8x32xbf16>
    %1 = vector.shape_cast %0 : vector<1x8x32xbf16> to vector<8x32xbf16>
    %c0_2 = arith.constant 0 : index
    %c0_3 = arith.constant 0 : index
    %2 = vector.load %arg3[%c0_2, %c0_3] : memref<32x96xbf16, #tpu.memory_space<vmem>>, vector<32x96xbf16>
    %cst = arith.constant dense<0.000000e+00> : vector<8x96xf32>
    %3 = tpu.matmul %1, %2, %cst {dimension_numbers = #tpu.dot_dimension_numbers<[1], [0], [0], [1], [0, 0, 1, 1], [], []>} : vector<8x32xbf16>, vector<32x96xbf16>, vector<8x96xf32> -> vector<8x96xf32>
    %c0_4 = arith.constant 0 : index
    %c0_5 = arith.constant 0 : index
    %4 = vector.load %arg4[%c0_4, %c0_5] : memref<1x96xf32, #tpu.memory_space<vmem>>, vector<1x96xf32>
    %5 = vector.shape_cast %4 : vector<1x96xf32> to vector<96xf32>
    %6 = vector.shape_cast %5 : vector<96xf32> to vector<1x96xf32>
    %7 = vector.broadcast %6 : vector<1x96xf32> to vector<8x96xf32>
    %8 = arith.addf %3, %7 : vector<8x96xf32>
    %9 = vector.extract_strided_slice %8 {offsets = [0, 0], sizes = [8, 32], strides = [1, 1]} : vector<8x96xf32> to vector<8x32xf32>
    %cst_6 = arith.constant 0.353553385 : f32
    %10 = vector.broadcast %cst_6 : f32 to vector<8x32xf32>
    %11 = arith.mulf %9, %10 : vector<8x32xf32>
    %12 = arith.truncf %11 : vector<8x32xf32> to vector<8x32xbf16>
    %13 = vector.extract_strided_slice %8 {offsets = [0, 32], sizes = [8, 32], strides = [1, 1]} : vector<8x96xf32> to vector<8x32xf32>
    %14 = arith.truncf %13 : vector<8x32xf32> to vector<8x32xbf16>
    %15 = vector.extract_strided_slice %8 {offsets = [0, 64], sizes = [8, 32], strides = [1, 1]} : vector<8x96xf32> to vector<8x32xf32>
    %16 = arith.truncf %15 : vector<8x32xf32> to vector<8x32xbf16>
    %17 = vector.extract_strided_slice %12 {offsets = [0, 0], sizes = [8, 8], strides = [1, 1]} : vector<8x32xbf16> to vector<8x8xbf16>
    %c0_7 = arith.constant 0 : index
    %c0_8 = arith.constant 0 : index
    %c0_9 = arith.constant 0 : index
    %c0_10 = arith.constant 0 : index
    %18 = vector.load %arg5[%c0_7, %c0_8, %c0_9, %c0_10] : memref<1x4x8x8xbf16, #tpu.memory_space<vmem>>, vector<1x1x8x8xbf16>
    %19 = vector.shape_cast %18 : vector<1x1x8x8xbf16> to vector<8x8xbf16>
    %20 = vector.shape_cast %17 : vector<8x8xbf16> to vector<1x1x8x8xbf16>
    tpu.vector_store %arg5[%c0_7, %c0_8, %c0_9, %c0_10], %20 {strides = array<i32>} : memref<1x4x8x8xbf16, #tpu.memory_space<vmem>>, vector<1x1x8x8xbf16>,
    %21 = vector.extract_strided_slice %14 {offsets = [0, 0], sizes = [8, 8], strides = [1, 1]} : vector<8x32xbf16> to vector<8x8xbf16>
    %c0_11 = arith.constant 0 : index
    %c0_12 = arith.constant 0 : index
    %c0_13 = arith.constant 0 : index
    %c0_14 = arith.constant 0 : index
    %22 = vector.load %arg6[%c0_11, %c0_12, %c0_13, %c0_14] : memref<1x4x8x8xbf16, #tpu.memory_space<vmem>>, vector<1x1x8x8xbf16>
    %23 = vector.shape_cast %22 : vector<1x1x8x8xbf16> to vector<8x8xbf16>
    %24 = vector.shape_cast %21 : vector<8x8xbf16> to vector<1x1x8x8xbf16>
    tpu.vector_store %arg6[%c0_11, %c0_12, %c0_13, %c0_14], %24 {strides = array<i32>} : memref<1x4x8x8xbf16, #tpu.memory_space<vmem>>, vector<1x1x8x8xbf16>,
    %25 = vector.extract_strided_slice %16 {offsets = [0, 0], sizes = [8, 8], strides = [1, 1]} : vector<8x32xbf16> to vector<8x8xbf16>
    %c0_15 = arith.constant 0 : index
    %c0_16 = arith.constant 0 : index
    %c0_17 = arith.constant 0 : index
    %c0_18 = arith.constant 0 : index
    %26 = vector.load %arg7[%c0_15, %c0_16, %c0_17, %c0_18] : memref<1x4x8x8xbf16, #tpu.memory_space<vmem>>, vector<1x1x8x8xbf16>
    %27 = vector.shape_cast %26 : vector<1x1x8x8xbf16> to vector<8x8xbf16>
    %28 = vector.shape_cast %25 : vector<8x8xbf16> to vector<1x1x8x8xbf16>
    tpu.vector_store %arg7[%c0_15, %c0_16, %c0_17, %c0_18], %28 {strides = array<i32>} : memref<1x4x8x8xbf16, #tpu.memory_space<vmem>>, vector<1x1x8x8xbf16>,
    %29 = vector.extract_strided_slice %12 {offsets = [0, 8], sizes = [8, 8], strides = [1, 1]} : vector<8x32xbf16> to vector<8x8xbf16>
    %c0_19 = arith.constant 0 : index
    %c1 = arith.constant 1 : index
    %c0_20 = arith.constant 0 : index
    %c0_21 = arith.constant 0 : index
    %30 = vector.load %arg5[%c0_19, %c1, %c0_20, %c0_21] : memref<1x4x8x8xbf16, #tpu.memory_space<vmem>>, vector<1x1x8x8xbf16>
    %31 = vector.shape_cast %30 : vector<1x1x8x8xbf16> to vector<8x8xbf16>
    %32 = vector.shape_cast %29 : vector<8x8xbf16> to vector<1x1x8x8xbf16>
    tpu.vector_store %arg5[%c0_19, %c1, %c0_20, %c0_21], %32 {strides = array<i32>} : memref<1x4x8x8xbf16, #tpu.memory_space<vmem>>, vector<1x1x8x8xbf16>,
    %33 = vector.extract_strided_slice %14 {offsets = [0, 8], sizes = [8, 8], strides = [1, 1]} : vector<8x32xbf16> to vector<8x8xbf16>
    %c0_22 = arith.constant 0 : index
    %c1_23 = arith.constant 1 : index
    %c0_24 = arith.constant 0 : index
    %c0_25 = arith.constant 0 : index
    %34 = vector.load %arg6[%c0_22, %c1_23, %c0_24, %c0_25] : memref<1x4x8x8xbf16, #tpu.memory_space<vmem>>, vector<1x1x8x8xbf16>
    %35 = vector.shape_cast %34 : vector<1x1x8x8xbf16> to vector<8x8xbf16>
    %36 = vector.shape_cast %33 : vector<8x8xbf16> to vector<1x1x8x8xbf16>
    tpu.vector_store %arg6[%c0_22, %c1_23, %c0_24, %c0_25], %36 {strides = array<i32>} : memref<1x4x8x8xbf16, #tpu.memory_space<vmem>>, vector<1x1x8x8xbf16>,
    %37 = vector.extract_strided_slice %16 {offsets = [0, 8], sizes = [8, 8], strides = [1, 1]} : vector<8x32xbf16> to vector<8x8xbf16>
    %c0_26 = arith.constant 0 : index
    %c1_27 = arith.constant 1 : index
    %c0_28 = arith.constant 0 : index
    %c0_29 = arith.constant 0 : index
    %38 = vector.load %arg7[%c0_26, %c1_27, %c0_28, %c0_29] : memref<1x4x8x8xbf16, #tpu.memory_space<vmem>>, vector<1x1x8x8xbf16>
    %39 = vector.shape_cast %38 : vector<1x1x8x8xbf16> to vector<8x8xbf16>
    %40 = vector.shape_cast %37 : vector<8x8xbf16> to vector<1x1x8x8xbf16>
    tpu.vector_store %arg7[%c0_26, %c1_27, %c0_28, %c0_29], %40 {strides = array<i32>} : memref<1x4x8x8xbf16, #tpu.memory_space<vmem>>, vector<1x1x8x8xbf16>,
    %41 = vector.extract_strided_slice %12 {offsets = [0, 16], sizes = [8, 8], strides = [1, 1]} : vector<8x32xbf16> to vector<8x8xbf16>
    %c0_30 = arith.constant 0 : index
    %c2 = arith.constant 2 : index
    %c0_31 = arith.constant 0 : index
    %c0_32 = arith.constant 0 : index
    %42 = vector.load %arg5[%c0_30, %c2, %c0_31, %c0_32] : memref<1x4x8x8xbf16, #tpu.memory_space<vmem>>, vector<1x1x8x8xbf16>
    %43 = vector.shape_cast %42 : vector<1x1x8x8xbf16> to vector<8x8xbf16>
    %44 = vector.shape_cast %41 : vector<8x8xbf16> to vector<1x1x8x8xbf16>
    tpu.vector_store %arg5[%c0_30, %c2, %c0_31, %c0_32], %44 {strides = array<i32>} : memref<1x4x8x8xbf16, #tpu.memory_space<vmem>>, vector<1x1x8x8xbf16>,
    %45 = vector.extract_strided_slice %14 {offsets = [0, 16], sizes = [8, 8], strides = [1, 1]} : vector<8x32xbf16> to vector<8x8xbf16>
    %c0_33 = arith.constant 0 : index
    %c2_34 = arith.constant 2 : index
    %c0_35 = arith.constant 0 : index
    %c0_36 = arith.constant 0 : index
    %46 = vector.load %arg6[%c0_33, %c2_34, %c0_35, %c0_36] : memref<1x4x8x8xbf16, #tpu.memory_space<vmem>>, vector<1x1x8x8xbf16>
    %47 = vector.shape_cast %46 : vector<1x1x8x8xbf16> to vector<8x8xbf16>
    %48 = vector.shape_cast %45 : vector<8x8xbf16> to vector<1x1x8x8xbf16>
    tpu.vector_store %arg6[%c0_33, %c2_34, %c0_35, %c0_36], %48 {strides = array<i32>} : memref<1x4x8x8xbf16, #tpu.memory_space<vmem>>, vector<1x1x8x8xbf16>,
    %49 = vector.extract_strided_slice %16 {offsets = [0, 16], sizes = [8, 8], strides = [1, 1]} : vector<8x32xbf16> to vector<8x8xbf16>
    %c0_37 = arith.constant 0 : index
    %c2_38 = arith.constant 2 : index
    %c0_39 = arith.constant 0 : index
    %c0_40 = arith.constant 0 : index
    %50 = vector.load %arg7[%c0_37, %c2_38, %c0_39, %c0_40] : memref<1x4x8x8xbf16, #tpu.memory_space<vmem>>, vector<1x1x8x8xbf16>
    %51 = vector.shape_cast %50 : vector<1x1x8x8xbf16> to vector<8x8xbf16>
    %52 = vector.shape_cast %49 : vector<8x8xbf16> to vector<1x1x8x8xbf16>
    tpu.vector_store %arg7[%c0_37, %c2_38, %c0_39, %c0_40], %52 {strides = array<i32>} : memref<1x4x8x8xbf16, #tpu.memory_space<vmem>>, vector<1x1x8x8xbf16>,
    %53 = vector.extract_strided_slice %12 {offsets = [0, 24], sizes = [8, 8], strides = [1, 1]} : vector<8x32xbf16> to vector<8x8xbf16>
    %c0_41 = arith.constant 0 : index
    %c3 = arith.constant 3 : index
    %c0_42 = arith.constant 0 : index
    %c0_43 = arith.constant 0 : index
    %54 = vector.load %arg5[%c0_41, %c3, %c0_42, %c0_43] : memref<1x4x8x8xbf16, #tpu.memory_space<vmem>>, vector<1x1x8x8xbf16>
    %55 = vector.shape_cast %54 : vector<1x1x8x8xbf16> to vector<8x8xbf16>
    %56 = vector.shape_cast %53 : vector<8x8xbf16> to vector<1x1x8x8xbf16>
    tpu.vector_store %arg5[%c0_41, %c3, %c0_42, %c0_43], %56 {strides = array<i32>} : memref<1x4x8x8xbf16, #tpu.memory_space<vmem>>, vector<1x1x8x8xbf16>,
    %57 = vector.extract_strided_slice %14 {offsets = [0, 24], sizes = [8, 8], strides = [1, 1]} : vector<8x32xbf16> to vector<8x8xbf16>
    %c0_44 = arith.constant 0 : index
    %c3_45 = arith.constant 3 : index
    %c0_46 = arith.constant 0 : index
    %c0_47 = arith.constant 0 : index
    %58 = vector.load %arg6[%c0_44, %c3_45, %c0_46, %c0_47] : memref<1x4x8x8xbf16, #tpu.memory_space<vmem>>, vector<1x1x8x8xbf16>
    %59 = vector.shape_cast %58 : vector<1x1x8x8xbf16> to vector<8x8xbf16>
    %60 = vector.shape_cast %57 : vector<8x8xbf16> to vector<1x1x8x8xbf16>
    tpu.vector_store %arg6[%c0_44, %c3_45, %c0_46, %c0_47], %60 {strides = array<i32>} : memref<1x4x8x8xbf16, #tpu.memory_space<vmem>>, vector<1x1x8x8xbf16>,
    %61 = vector.extract_strided_slice %16 {offsets = [0, 24], sizes = [8, 8], strides = [1, 1]} : vector<8x32xbf16> to vector<8x8xbf16>
    %c0_48 = arith.constant 0 : index
    %c3_49 = arith.constant 3 : index
    %c0_50 = arith.constant 0 : index
    %c0_51 = arith.constant 0 : index
    %62 = vector.load %arg7[%c0_48, %c3_49, %c0_50, %c0_51] : memref<1x4x8x8xbf16, #tpu.memory_space<vmem>>, vector<1x1x8x8xbf16>
    %63 = vector.shape_cast %62 : vector<1x1x8x8xbf16> to vector<8x8xbf16>
    %64 = vector.shape_cast %61 : vector<8x8xbf16> to vector<1x1x8x8xbf16>
    tpu.vector_store %arg7[%c0_48, %c3_49, %c0_50, %c0_51], %64 {strides = array<i32>} : memref<1x4x8x8xbf16, #tpu.memory_space<vmem>>, vector<1x1x8x8xbf16>,
    return
  }
  func.func @transform_0(%arg0: i32, %arg1: i32) -> (i32, i32, i32) {
    %c0_i32 = arith.constant 0 : i32
    %c0_i32_0 = arith.constant 0 : i32
    return %arg0, %arg1, %c0_i32 : i32, i32, i32
  }
  func.func @transform_1(%arg0: i32, %arg1: i32) -> (i32, i32) {
    %c0_i32 = arith.constant 0 : i32
    %c0_i32_0 = arith.constant 0 : i32
    %c0_i32_1 = arith.constant 0 : i32
    return %c0_i32, %c0_i32_0 : i32, i32
  }
  func.func @transform_2(%arg0: i32, %arg1: i32) -> (i32, i32) {
    %c0_i32 = arith.constant 0 : i32
    %c0_i32_0 = arith.constant 0 : i32
    %c0_i32_1 = arith.constant 0 : i32
    return %c0_i32, %c0_i32_0 : i32, i32
  }
  func.func @transform_3(%arg0: i32, %arg1: i32) -> (i32, i32, i32, i32) {
    %c0_i32 = arith.constant 0 : i32
    %c0_i32_0 = arith.constant 0 : i32
    %c0_i32_1 = arith.constant 0 : i32
    return %arg0, %c0_i32, %arg1, %c0_i32_0 : i32, i32, i32, i32
  }
  func.func @transform_4(%arg0: i32, %arg1: i32) -> (i32, i32, i32, i32) {
    %c0_i32 = arith.constant 0 : i32
    %c0_i32_0 = arith.constant 0 : i32
    %c0_i32_1 = arith.constant 0 : i32
    return %arg0, %c0_i32, %arg1, %c0_i32_0 : i32, i32, i32, i32
  }
  func.func @transform_5(%arg0: i32, %arg1: i32) -> (i32, i32, i32, i32) {
    %c0_i32 = arith.constant 0 : i32
    %c0_i32_0 = arith.constant 0 : i32
    %c0_i32_1 = arith.constant 0 : i32
    return %arg0, %c0_i32, %arg1, %c0_i32_0 : i32, i32, i32, i32
  }
}

</mosaic_0001>

<llo_original>
// kernel: tpu_custom_call.1
$region0: #{tpu_custom_call.1}
  #allocation0 [shape = 'u32[]', space=smem, size = 0x4, offset = 0x4, fixed_abs, tag = 'smem constant byte address 0x4 - core index']
  #allocation1 [shape = 'u32[72,128]{1,0:T(1,128)}', space=vmem, size = 0x9000, scoped, tag = 'internal scratch']
  %s0 = inlined_call_operand.hbm [shape: bf16[2,8,32], index: 0, kind: input, shape index: {}]
  %s1 = inlined_call_operand.hbm [shape: bf16[32,96], index: 1, kind: input, shape index: {}]
  %s2 = inlined_call_operand.vmem [shape: f32[1,96], index: 2, kind: input, shape index: {}]
  %s3 = inlined_call_operand.hbm [shape: bf16[2,4,8,8], index: 3, kind: output, shape index: {0}]
  %s4 = inlined_call_operand.hbm [shape: bf16[2,4,8,8], index: 4, kind: output, shape index: {1}]
  %s5 = inlined_call_operand.hbm [shape: bf16[2,4,8,8], index: 5, kind: output, shape index: {2}]
  %6 = xla_tuple %s3, %s4, %s5
  %s7 = sld [smem:[#allocation0]]
  $region69: #{tpu_custom_call.1} parent=0
    _
  %s9 = ssub.s32 1, %s7
  %s10 = scalar_select 0, %s9, %s7
  $region1: #{tpu_custom_call.1} parent=0
    #allocation2 [shape = 'u8[4096]{0}', space=vmem, size = 0x1000, scoped, tag = 'input window, operand 0']
    #allocation3 [shape = 's32[2]{0}', space=sflag, size = 0x8, scoped, tag = 'scoped memory for tpu_custom_call.1']
    #allocation4 [shape = 's32[2]{0}', space=sflag, size = 0x8, scoped, tag = 'scoped memory for tpu_custom_call.1']
    #allocation5 [shape = 'u8[8192]{0}', space=vmem, size = 0x2000, scoped, tag = 'input window, operand 1, single buffered']
    #allocation6 [shape = 's32[1]{0}', space=sflag, size = 0x4, scoped, tag = 'scoped memory for tpu_custom_call.1']
    #allocation7 [shape = 'u8[16384]{0}', space=vmem, size = 0x4000, scoped, tag = 'output window, operand 0']
    #allocation8 [shape = 'u8[16384]{0}', space=vmem, size = 0x4000, scoped, tag = 'output window, operand 1']
    #allocation9 [shape = 's32[2]{0}', space=sflag, size = 0x8, scoped, tag = 'scoped memory for tpu_custom_call.1']
    #allocation10 [shape = 'u8[16384]{0}', space=vmem, size = 0x4000, scoped, tag = 'output window, operand 2']
    %11 = vsyncpa [#allocation3], 0
    %s12 = scalar_lea.sflag [#allocation3], 1
    %13 = vsyncpa %s12, 0
    %14 = vsyncpa [#allocation6], 0
    %15 = vsyncpa [#allocation4], 0
    %s16 = scalar_lea.sflag [#allocation4], 1
    %17 = vsyncpa %s16, 0
    %18 = vsyncpa [#allocation9], 0
    %s19 = scalar_lea.sflag [#allocation9], 1
    %20 = vsyncpa %s19, 0
    loop: start=0, step=1, limit=4
    $region2: #{tpu_custom_call.1} parent=1 // loop_pre_header
      _
    $region3: #{tpu_custom_call.1} parent=1 // loop_header
      %s22 = sphi 0, %s26
      %p23 = scmp.ge.s32.totalorder %s22, 4
      %s29 = sphi 0, %s41
      %s30 = sphi 0, %s37
      %s31 = sphi 0, %s29
      %s32 = sphi 0, %s30
      %s33 = sphi 0, %s31
      %s34 = sphi 0, %s32
      %s46 = sphi 0, %s48
      %s49 = sphi 0, %s46
      %s50 = sphi 0, %s49
      %s66 = sphi 0, %s50
      %s70 = sphi 0, %s70
      %s72 = sphi 0, %s70
      %s73 = sphi 0, %s72
      %s87 = sphi 0, %s73
      %s91 = sphi 0, %s91
      %s93 = sphi 0, %s91
      %s94 = sphi 0, %s93
      %s108 = sphi 0, %s94
      %s116 = sphi 0, %s118
      %s119 = sphi 0, %s116
      %s120 = sphi 0, %s119
      %s136 = sphi 0, %s120
      %s144 = sphi 0, %s146
      %s147 = sphi 0, %s144
      %s148 = sphi 0, %s147
      %s164 = sphi 0, %s148
      %s172 = sphi 0, %s174
      %s175 = sphi 0, %s172
      %s176 = sphi 0, %s175
      %s192 = sphi 0, %s176
    $region4: #{tpu_custom_call.1} parent=1 // loop_header_branch
      %25 = sbr.rel (%p23) target = $region8
    $region5: #{tpu_custom_call.1} parent=1 // loop_body
      %s27 = ssub.s32 %s22, 1
      %s28 = ssub.s32 %s22, 2
      %s35 = sadd.s32 1, %s30
      %p36 = scmp.ge.s32.totalorder %s35, 1
      %s37 = scalar_select %p36, 0, %s35
      %s38 = sadd.s32 1, %s29
      %s39 = scalar_select %p36, %s38, %s29
      %p40 = scmp.ge.s32.totalorder %s39, 2
      %s41 = scalar_select %p40, 0, %s39
      %s42 = ssub.s32 %s29, %s41
      %s43 = ssub.s32 %s30, %s37
      %s44 = sor.u32 %s42, %s43
      %p45 = scmp.eq.s32.totalorder %s44, 0
      %s47 = sadd.s32 %s46, 1
      %s48 = scalar_select %p45, %s46, %s47
      %p51 = pneg %p45
      %p52 = scmp.eq.s32.totalorder %s22, 1
      %p53 = por %p51, %p52
      %p54 = scmp.ne.s32.totalorder %s46, %s49
      %p55 = scmp.eq.s32.totalorder %s22, 0
      %p56 = por %p54, %p55
      %p57 = scmp.ne.s32.totalorder %s46, %s49
      %p58 = scmp.eq.s32.totalorder %s27, 1
      %p59 = por %p57, %p58
      %p60 = scmp.ne.s32.totalorder %s49, %s50
      %p61 = scmp.eq.s32.totalorder %s27, 0
      %p62 = por %p60, %p61
      %p63 = scmp.ne.s32.totalorder %s49, %s50
      %p64 = scmp.eq.s32.totalorder %s28, 1
      %p65 = por %p63, %p64
      %p67 = scmp.ne.s32.totalorder %s50, %s66
      %p68 = scmp.eq.s32.totalorder %s28, 0
      %p69 = por %p67, %p68
      %s71 = sadd.s32 %s70, 1
      %p74 = scmp.eq.s32.totalorder %s22, 1
      %p75 = scmp.ne.s32.totalorder %s70, %s72
      %p76 = scmp.eq.s32.totalorder %s22, 0
      %p77 = por %p75, %p76
      %p78 = scmp.ne.s32.totalorder %s70, %s72
      %p79 = scmp.eq.s32.totalorder %s27, 1
      %p80 = por %p78, %p79
      %p81 = scmp.ne.s32.totalorder %s72, %s73
      %p82 = scmp.eq.s32.totalorder %s27, 0
      %p83 = por %p81, %p82
      %p84 = scmp.ne.s32.totalorder %s72, %s73
      %p85 = scmp.eq.s32.totalorder %s28, 1
      %p86 = por %p84, %p85
      %p88 = scmp.ne.s32.totalorder %s73, %s87
      %p89 = scmp.eq.s32.totalorder %s28, 0
      %p90 = por %p88, %p89
      %s92 = sadd.s32 %s91, 1
      %p95 = scmp.eq.s32.totalorder %s22, 1
      %p96 = scmp.ne.s32.totalorder %s91, %s93
      %p97 = scmp.eq.s32.totalorder %s22, 0
      %p98 = por %p96, %p97
      %p99 = scmp.ne.s32.totalorder %s91, %s93
      %p100 = scmp.eq.s32.totalorder %s27, 1
      %p101 = por %p99, %p100
      %p102 = scmp.ne.s32.totalorder %s93, %s94
      %p103 = scmp.eq.s32.totalorder %s27, 0
      %p104 = por %p102, %p103
      %p105 = scmp.ne.s32.totalorder %s93, %s94
      %p106 = scmp.eq.s32.totalorder %s28, 1
      %p107 = por %p105, %p106
      %p109 = scmp.ne.s32.totalorder %s94, %s108
      %p110 = scmp.eq.s32.totalorder %s28, 0
      %p111 = por %p109, %p110
      %s112 = ssub.s32 %s29, %s41
      %s113 = ssub.s32 %s30, %s37
      %s114 = sor.u32 %s112, %s113
      %p115 = scmp.eq.s32.totalorder %s114, 0
      %s117 = sadd.s32 %s116, 1
      %s118 = scalar_select %p115, %s116, %s117
      %p121 = pneg %p115
      %p122 = scmp.eq.s32.totalorder %s22, 1
      %p123 = por %p121, %p122
      %p124 = scmp.ne.s32.totalorder %s116, %s119
      %p125 = scmp.eq.s32.totalorder %s22, 0
      %p126 = por %p124, %p125
      %p127 = scmp.ne.s32.totalorder %s116, %s119
      %p128 = scmp.eq.s32.totalorder %s27, 1
      %p129 = por %p127, %p128
      %p130 = scmp.ne.s32.totalorder %s119, %s120
      %p131 = scmp.eq.s32.totalorder %s27, 0
      %p132 = por %p130, %p131
      %p133 = scmp.ne.s32.totalorder %s119, %s120
      %p134 = scmp.eq.s32.totalorder %s28, 1
      %p135 = por %p133, %p134
      %p137 = scmp.ne.s32.totalorder %s120, %s136
      %p138 = scmp.eq.s32.totalorder %s28, 0
      %p139 = por %p137, %p138
      %s140 = ssub.s32 %s29, %s41
      %s141 = ssub.s32 %s30, %s37
      %s142 = sor.u32 %s140, %s141
      %p143 = scmp.eq.s32.totalorder %s142, 0
      %s145 = sadd.s32 %s144, 1
      %s146 = scalar_select %p143, %s144, %s145
      %p149 = pneg %p143
      %p150 = scmp.eq.s32.totalorder %s22, 1
      %p151 = por %p149, %p150
      %p152 = scmp.ne.s32.totalorder %s144, %s147
      %p153 = scmp.eq.s32.totalorder %s22, 0
      %p154 = por %p152, %p153
      %p155 = scmp.ne.s32.totalorder %s144, %s147
      %p156 = scmp.eq.s32.totalorder %s27, 1
      %p157 = por %p155, %p156
      %p158 = scmp.ne.s32.totalorder %s147, %s148
      %p159 = scmp.eq.s32.totalorder %s27, 0
      %p160 = por %p158, %p159
      %p161 = scmp.ne.s32.totalorder %s147, %s148
      %p162 = scmp.eq.s32.totalorder %s28, 1
      %p163 = por %p161, %p162
      %p165 = scmp.ne.s32.totalorder %s148, %s164
      %p166 = scmp.eq.s32.totalorder %s28, 0
      %p167 = por %p165, %p166
      %s168 = ssub.s32 %s29, %s41
      %s169 = ssub.s32 %s30, %s37
      %s170 = sor.u32 %s168, %s169
      %p171 = scmp.eq.s32.totalorder %s170, 0
      %s173 = sadd.s32 %s172, 1
      %s174 = scalar_select %p171, %s172, %s173
      %p177 = pneg %p171
      %p178 = scmp.eq.s32.totalorder %s22, 1
      %p179 = por %p177, %p178
      %p180 = scmp.ne.s32.totalorder %s172, %s175
      %p181 = scmp.eq.s32.totalorder %s22, 0
      %p182 = por %p180, %p181
      %p183 = scmp.ne.s32.totalorder %s172, %s175
      %p184 = scmp.eq.s32.totalorder %s27, 1
      %p185 = por %p183, %p184
      %p186 = scmp.ne.s32.totalorder %s175, %s176
      %p187 = scmp.eq.s32.totalorder %s27, 0
      %p188 = por %p186, %p187
      %p189 = scmp.ne.s32.totalorder %s175, %s176
      %p190 = scmp.eq.s32.totalorder %s28, 1
      %p191 = por %p189, %p190
      %p193 = scmp.ne.s32.totalorder %s176, %s192
      %p194 = scmp.eq.s32.totalorder %s28, 0
      %p195 = por %p193, %p194
      %p196 = scmp.le.s32.totalorder 1, %s22
      %p197 = scmp.lt.s32.totalorder %s22, 3
      %p198 = pnand %p196, %p197
      %p199 = pneg %p198
      // Predicated region
      $region9: #{tpu_custom_call.1} parent=5 // pred_check
        _
      $region10: #{tpu_custom_call.1} parent=5 // pred_check_branch
        %201 = sbr.rel (%p198) target = $region12
      $region11: #{tpu_custom_call.1} parent=5 // pred_region
        %s202 = ssub.s32 %s22, 1
        // Predicated region
        $region13: #{tpu_custom_call.1} parent=11 // pred_check
          %p203 = pneg %p83
        $region14: #{tpu_custom_call.1} parent=11 // pred_check_branch
          %205 = sbr.rel (%p203) target = $region16
        $region15: #{tpu_custom_call.1} parent=11 // pred_region
          %207 = vsyncadd [#allocation6], 0
          %s208 = sshll.u32 %s1, 4
          %s209 = int_to_ptr.hbm [resolvable:$true] %s208
          %s210 = sshll.u32 [#allocation5], 4
          %s211 = int_to_ptr.vmem [resolvable:$true] %s210
          %216 = dma.hbm_to_vmem [thread:$0]  %s209, 256, %s211, [#allocation6], 64, 64, 4
        $region16: #{tpu_custom_call.1} parent=11 // pred_fallthru
          _
        // Predicated region
        $region17: #{tpu_custom_call.1} parent=11 // pred_check
          %p217 = pneg %p104
        $region18: #{tpu_custom_call.1} parent=11 // pred_check_branch
          %219 = sbr.rel (%p217) target = $region20
        $region19: #{tpu_custom_call.1} parent=11 // pred_region
          _
        $region20: #{tpu_custom_call.1} parent=11 // pred_fallthru
          _
      $region12: #{tpu_custom_call.1} parent=5 // pred_fallthru
        _
      %p220 = scmp.lt.s32.totalorder %s22, 2
      // Predicated region
      $region21: #{tpu_custom_call.1} parent=5 // pred_check
        %p221 = pneg %p220
      $region22: #{tpu_custom_call.1} parent=5 // pred_check_branch
        %223 = sbr.rel (%p221) target = $region24
      $region23: #{tpu_custom_call.1} parent=5 // pred_region
        // Predicated region
        $region25: #{tpu_custom_call.1} parent=23 // pred_check
          %p224 = pneg %p56
        $region26: #{tpu_custom_call.1} parent=23 // pred_check_branch
          %226 = sbr.rel (%p224) target = $region28
        $region27: #{tpu_custom_call.1} parent=23 // pred_region
          %s227 = sand.u32 %s46, 1
          %s228 = scalar_lea.sflag [#allocation3], %s227
          %s229 = sand.u32 %s46, 1
          %s230 = smul.addr %s229, 4
          %s231 = scalar_lea.vmem [#allocation2], %s230
          %233 = vsyncadd %s228, 0
          %s234 = sadd.s32 %s30, %s29
          %s235 = smul.addr %s234, 4
          %s236 = scalar_lea.hbm %s0, %s235
          %s238 = sshll.u32 %s236, 4
          %s239 = int_to_ptr.hbm [resolvable:$true] %s238
          %s240 = sshll.u32 %s231, 4
          %s241 = int_to_ptr.vmem [resolvable:$true] %s240
          %243 = dma.hbm_to_vmem [thread:$0]  %s239, 64, %s241, %s228
        $region28: #{tpu_custom_call.1} parent=23 // pred_fallthru
          _
      $region24: #{tpu_custom_call.1} parent=5 // pred_fallthru
        _
      %p244 = scmp.le.s32.totalorder 1, %s22
      %p245 = scmp.lt.s32.totalorder %s22, 3
      %p246 = pnand %p244, %p245
      %p247 = pneg %p246
      // Predicated region
      $region29: #{tpu_custom_call.1} parent=5 // pred_check
        _
      $region30: #{tpu_custom_call.1} parent=5 // pred_check_branch
        %249 = sbr.rel (%p246) target = $region32
      $region31: #{tpu_custom_call.1} parent=5 // pred_region
        %s250 = ssub.s32 %s22, 1
        %s251 = sand.u32 %s49, 1
        %s252 = scalar_lea.sflag [#allocation3], %s251
        %s253 = sand.u32 %s49, 1
        %s254 = smul.addr %s253, 4
        %s255 = scalar_lea.vmem [#allocation2], %s254
        // Predicated region
        $region33: #{tpu_custom_call.1} parent=31 // pred_check
          %p256 = pneg %p62
        $region34: #{tpu_custom_call.1} parent=31 // pred_check_branch
          %258 = sbr.rel (%p256) target = $region36
        $region35: #{tpu_custom_call.1} parent=31 // pred_region
          %260 = dma.done %s252, 64
        $region36: #{tpu_custom_call.1} parent=31 // pred_fallthru
          _
        // Predicated region
        $region37: #{tpu_custom_call.1} parent=31 // pred_check
          %p261 = pneg %p83
        $region38: #{tpu_custom_call.1} parent=31 // pred_check_branch
          %263 = sbr.rel (%p261) target = $region40
        $region39: #{tpu_custom_call.1} parent=31 // pred_region
          %265 = dma.done [#allocation6], 256
        $region40: #{tpu_custom_call.1} parent=31 // pred_fallthru
          _
        %s266 = sand.u32 %s49, 1
        %s267 = scalar_lea.sflag [#allocation3], %s266
        %s268 = sand.u32 %s49, 1
        %s269 = smul.addr %s268, 4
        %s270 = scalar_lea.vmem [#allocation2], %s269
        %p271 = pneg %p62
        %p272 = pneg %p59
        %p273 = pneg %p83
        %p274 = pneg %p80
        %p275 = pneg %p104
        %p276 = pneg %p101
        %p277 = pneg %p132
        %p278 = pneg %p129
        %s279 = sand.u32 %s119, 1
        %s280 = scalar_lea.sflag [#allocation4], %s279
        %s281 = sand.u32 %s119, 1
        %s282 = smul.addr %s281, 16
        %s283 = scalar_lea.vmem [#allocation7], %s282
        %p284 = pneg %p160
        %p285 = pneg %p157
        %s286 = sand.u32 %s27, 1
        %s287 = scalar_lea.sflag [#allocation9], %s286
        %s288 = sand.u32 %s147, 1
        %s289 = smul.addr %s288, 16
        %s290 = scalar_lea.vmem [#allocation8], %s289
        %p291 = pneg %p188
        %p292 = pneg %p185
        %s293 = sand.u32 %s27, 1
        %s294 = scalar_lea.sflag [#allocation9], %s293
        %s295 = sand.u32 %s175, 1
        %s296 = smul.addr %s295, 16
        %s297 = scalar_lea.vmem [#allocation10], %s296
        %v299 = vld [vmem:[%s255] sm:$0xf]
        %v300 = vld [vmem:[#allocation5] sm:$0xf]
        %v301 = vld [vmem:[#allocation5 + $0x4] sm:$0xf]
        %v302 = vld [vmem:[#allocation5 + $0x8] sm:$0xf]
        %v303 = vld [vmem:[#allocation5 + $0xc] sm:$0xf]
        %v304 = vld [vmem:[%s2] sm:$0x1]
        %v306 = vperm.slane %v304, 0
        %v312 = vunpack.c.l.b16 %v300
        %v313 = vunpack.c.l.b16 %v301
        %v314 = vunpack.c.l.b16 %v302
        %v315 = vunpack.c.l.b16 %v303
        %v316 = vpack.c.b16 %v313, %v312
        %v317 = vpack.c.b16 %v315, %v314
        %vm320 = vcmask 261120
        %v322 = vsel %vm320, %v299, 0
        %324 = vmatpush.bf16.msra.mxu0 0
        %325 = vmatpush.bf16.msra.mxu0 0
        %326 = vmatpush.bf16.msra.mxu0 0
        %327 = vmatpush.bf16.msra.mxu0 0
        %328 = vmatpush.bf16.msra.mxu0 0
        %329 = vmatpush.bf16.msra.mxu0 0
        %330 = vmatpush.bf16.msra.mxu0 %v317
        %331 = vmatpush.bf16.msra.mxu0 %v316
        %332 = vmatmul.bf16.gmra.mxu0 %v322
        %v333 = vpop.f32.mrf.mxu0
        %v334 = vadd.f32 %v306, %v333
        %v335 = vpop.f32.mrf.mxu0
        %336 = vdwg.mxu0
        %v337 = vmul.f32 %v334, 0.35355338
        %v338 = vpack.c.bf16 %v337, %v337
        %v339 = vpack.c.bf16 %v334, %v334
        %vm340 = vcmask 60416
        %341 = vst.msk [vmem:[%s283] sm:$0xf] %vm340, %v338
        %343 = vrot.lane.b32.xlu0 %v339, 96
        %v344 = vpop.permute.xlu0 %343
        %346 = vst.msk [vmem:[%s290] sm:$0xf] %vm340, %v344
        %347 = vrot.lane.b32.xlu0 %v339, 64
        %v348 = vpop.permute.xlu0 %347
        %350 = vst.msk [vmem:[%s297] sm:$0xf] %vm340, %v348
        %352 = vrot.lane.b32.xlu0 %v338, 120
        %v353 = vpop.permute.xlu0 %352
        %s355 = scalar_lea.vmem %s283, 4 [#allocation7]
        %356 = vst.msk [vmem:[%s355] sm:$0xf] %vm340, %v353
        %357 = vrot.lane.b32.xlu0 %v339, 88
        %v358 = vpop.permute.xlu0 %357
        %s360 = scalar_lea.vmem %s290, 4 [#allocation8]
        %361 = vst.msk [vmem:[%s360] sm:$0xf] %vm340, %v358
        %362 = vrot.lane.b32.xlu0 %v339, 56
        %v363 = vpop.permute.xlu0 %362
        %s365 = scalar_lea.vmem %s297, 4 [#allocation10]
        %366 = vst.msk [vmem:[%s365] sm:$0xf] %vm340, %v363
        %367 = vrot.lane.b32.xlu0 %v338, 112
        %v368 = vpop.permute.xlu0 %367
        %s370 = scalar_lea.vmem %s283, 8 [#allocation7]
        %371 = vst.msk [vmem:[%s370] sm:$0xf] %vm340, %v368
        %372 = vrot.lane.b32.xlu0 %v339, 80
        %v373 = vpop.permute.xlu0 %372
        %s375 = scalar_lea.vmem %s290, 8 [#allocation8]
        %376 = vst.msk [vmem:[%s375] sm:$0xf] %vm340, %v373
        %377 = vrot.lane.b32.xlu0 %v339, 48
        %v378 = vpop.permute.xlu0 %377
        %s380 = scalar_lea.vmem %s297, 8 [#allocation10]
        %381 = vst.msk [vmem:[%s380] sm:$0xf] %vm340, %v378
        %382 = vrot.lane.b32.xlu0 %v338, 104
        %v383 = vpop.permute.xlu0 %382
        %s385 = scalar_lea.vmem %s283, 12 [#allocation7]
        %386 = vst.msk [vmem:[%s385] sm:$0xf] %vm340, %v383
        %387 = vrot.lane.b32.xlu0 %v339, 72
        %v388 = vpop.permute.xlu0 %387
        %s390 = scalar_lea.vmem %s290, 12 [#allocation8]
        %391 = vst.msk [vmem:[%s390] sm:$0xf] %vm340, %v388
        %392 = vrot.lane.b32.xlu0 %v339, 40
        %v393 = vpop.permute.xlu0 %392
        %s395 = scalar_lea.vmem %s297, 12 [#allocation10]
        %396 = vst.msk [vmem:[%s395] sm:$0xf] %vm340, %v393
        %s397 = sand.u32 %s119, 1
        %s398 = scalar_lea.sflag [#allocation4], %s397
        %s399 = sand.u32 %s119, 1
        %s400 = smul.addr %s399, 16
        %s401 = scalar_lea.vmem [#allocation7], %s400
        %s402 = sand.u32 %s27, 1
        %s403 = scalar_lea.sflag [#allocation9], %s402
        %s404 = sand.u32 %s147, 1
        %s405 = smul.addr %s404, 16
        %s406 = scalar_lea.vmem [#allocation8], %s405
        %s407 = sand.u32 %s27, 1
        %s408 = scalar_lea.sflag [#allocation9], %s407
        %s409 = sand.u32 %s175, 1
        %s410 = smul.addr %s409, 16
        %s411 = scalar_lea.vmem [#allocation10], %s410
        // Predicated region
        $region41: #{tpu_custom_call.1} parent=31 // pred_check
          %p412 = pneg %p129
        $region42: #{tpu_custom_call.1} parent=31 // pred_check_branch
          %414 = sbr.rel (%p412) target = $region44
        $region43: #{tpu_custom_call.1} parent=31 // pred_region
          %416 = vsyncadd %s398, 0
          %s417 = smul.addr %s31, 4
          %s418 = sadd.s32 %s32, %s417
          %s419 = smul.addr %s418, 4
          %s420 = scalar_lea.hbm %s3, %s419
          %s421 = sshll.u32 %s401, 4
          %s422 = int_to_ptr.vmem [resolvable:$true] %s421
          %s423 = sshll.u32 %s420, 4
          %s424 = int_to_ptr.hbm [resolvable:$true] %s423
          %429 = dma.vmem_to_hbm [thread:$0]  %s422, 256, %s424, %s398, 64, 64, 4
        $region44: #{tpu_custom_call.1} parent=31 // pred_fallthru
          _
        // Predicated region
        $region45: #{tpu_custom_call.1} parent=31 // pred_check
          %p430 = pneg %p157
        $region46: #{tpu_custom_call.1} parent=31 // pred_check_branch
          %432 = sbr.rel (%p430) target = $region48
        $region47: #{tpu_custom_call.1} parent=31 // pred_region
          %434 = vsyncadd %s403, 0
          %s435 = smul.addr %s31, 4
          %s436 = sadd.s32 %s32, %s435
          %s437 = smul.addr %s436, 4
          %s438 = scalar_lea.hbm %s4, %s437
          %s439 = sshll.u32 %s406, 4
          %s440 = int_to_ptr.vmem [resolvable:$true] %s439
          %s441 = sshll.u32 %s438, 4
          %s442 = int_to_ptr.hbm [resolvable:$true] %s441
          %447 = dma.vmem_to_hbm [thread:$0]  %s440, 256, %s442, %s403, 64, 64, 4
        $region48: #{tpu_custom_call.1} parent=31 // pred_fallthru
          _
        // Predicated region
        $region49: #{tpu_custom_call.1} parent=31 // pred_check
          %p448 = pneg %p185
        $region50: #{tpu_custom_call.1} parent=31 // pred_check_branch
          %450 = sbr.rel (%p448) target = $region52
        $region51: #{tpu_custom_call.1} parent=31 // pred_region
          %452 = vsyncadd %s408, 0
          %s453 = smul.addr %s31, 4
          %s454 = sadd.s32 %s32, %s453
          %s455 = smul.addr %s454, 4
          %s456 = scalar_lea.hbm %s5, %s455
          %s457 = sshll.u32 %s411, 4
          %s458 = int_to_ptr.vmem [resolvable:$true] %s457
          %s459 = sshll.u32 %s456, 4
          %s460 = int_to_ptr.hbm [resolvable:$true] %s459
          %465 = dma.vmem_to_hbm [thread:$0]  %s458, 256, %s460, %s408, 64, 64, 4
        $region52: #{tpu_custom_call.1} parent=31 // pred_fallthru
          _
      $region32: #{tpu_custom_call.1} parent=5 // pred_fallthru
        _
      %p466 = scmp.le.s32.totalorder 2, %s22
      // Predicated region
      $region53: #{tpu_custom_call.1} parent=5 // pred_check
        %p467 = pneg %p466
      $region54: #{tpu_custom_call.1} parent=5 // pred_check_branch
        %469 = sbr.rel (%p467) target = $region56
      $region55: #{tpu_custom_call.1} parent=5 // pred_region
        %s470 = ssub.s32 %s22, 2
        // Predicated region
        $region57: #{tpu_custom_call.1} parent=55 // pred_check
          %p471 = pneg %p135
        $region58: #{tpu_custom_call.1} parent=55 // pred_check_branch
          %473 = sbr.rel (%p471) target = $region60
        $region59: #{tpu_custom_call.1} parent=55 // pred_region
          %s474 = sand.u32 %s120, 1
          %s475 = scalar_lea.sflag [#allocation4], %s474
          %s476 = sand.u32 %s120, 1
          %s477 = smul.addr %s476, 16
          %s478 = scalar_lea.vmem [#allocation7], %s477
          %480 = dma.done %s475, 256
        $region60: #{tpu_custom_call.1} parent=55 // pred_fallthru
          _
        // Predicated region
        $region61: #{tpu_custom_call.1} parent=55 // pred_check
          %p481 = pneg %p163
        $region62: #{tpu_custom_call.1} parent=55 // pred_check_branch
          %483 = sbr.rel (%p481) target = $region64
        $region63: #{tpu_custom_call.1} parent=55 // pred_region
          %s484 = sand.u32 %s28, 1
          %s485 = scalar_lea.sflag [#allocation9], %s484
          %s486 = sand.u32 %s148, 1
          %s487 = smul.addr %s486, 16
          %s488 = scalar_lea.vmem [#allocation8], %s487
          %490 = dma.done %s485, 256
        $region64: #{tpu_custom_call.1} parent=55 // pred_fallthru
          _
        // Predicated region
        $region65: #{tpu_custom_call.1} parent=55 // pred_check
          %p491 = pneg %p191
        $region66: #{tpu_custom_call.1} parent=55 // pred_check_branch
          %493 = sbr.rel (%p491) target = $region68
        $region67: #{tpu_custom_call.1} parent=55 // pred_region
          %s494 = sand.u32 %s28, 1
          %s495 = scalar_lea.sflag [#allocation9], %s494
          %s496 = sand.u32 %s176, 1
          %s497 = smul.addr %s496, 16
          %s498 = scalar_lea.vmem [#allocation10], %s497
          %500 = dma.done %s495, 256
        $region68: #{tpu_custom_call.1} parent=55 // pred_fallthru
          _
      $region56: #{tpu_custom_call.1} parent=5 // pred_fallthru
        _
    $region6: #{tpu_custom_call.1} parent=1 // loop_footer
      %s26 = sadd.s32 1, %s22
    $region7: #{tpu_custom_call.1} parent=1 // loop_footer_branch
      %21 = sbr.rel target = $region3
    $region8: #{tpu_custom_call.1} parent=1 // loop_exit
      _
    %501 = vsyncpa [#allocation3], 1
    %s502 = scalar_lea.sflag [#allocation3], 1
    %503 = vsyncpa %s502, 1
    %504 = vsyncpa [#allocation6], 1
    %505 = vsyncpa [#allocation4], 1
    %s506 = scalar_lea.sflag [#allocation4], 1
    %507 = vsyncpa %s506, 1
    %508 = vsyncpa [#allocation9], 1
    %s509 = scalar_lea.sflag [#allocation9], 1
    %510 = vsyncpa %s509, 1

</llo_original>
